<compile_context>
chip_gen: v7x
topology: tpu7x:2x2x1
jax: 0.10.0
libtpu: 0.0.40
codegen_flags: <defaults>
</compile_context>

<pallas_src>
import jax
import jax.numpy as jnp
from jax.experimental import pallas as pl
from jax.experimental.pallas import tpu as pltpu

BN_EPS = 1e-5


# --------------------------------------------------------------------------
# Kernel
# --------------------------------------------------------------------------
def _generator_kernel(x_ref, w1_ref, b1_ref, w2_ref, b2_ref, w3_ref, b3_ref,
                      o_ref, h_ref):
    """Fused Generator forward.

    Grid = (nj out_dim tiles  [OUTER, sequential],
            ni batch tiles    [INNER, sequential]).

    Correctness of the hidden-activation cache relies on the out_dim axis
    being the OUTERMOST, sequentially executed axis: all batch tiles' hidden
    activations are computed during the first outer iteration (j == 0) into
    the persistent VMEM scratch h_ref and reused for every later j.  Do not
    reorder the grid axes or mark them "parallel" without revisiting this.
    """
    j = pl.program_id(0)   # out_dim tile index (outer)
    i = pl.program_id(1)   # batch tile index   (inner)

    @pl.when(j == 0)
    def _compute_hidden():
        # Linear1 (+ folded BN1) + ReLU   (Dropout = identity at inference)
        h1 = jnp.dot(x_ref[...], w1_ref[...],
                     preferred_element_type=jnp.float32)
        h1 = jnp.maximum(h1 + b1_ref[...], 0.0)
        # Linear2 (+ folded BN2) + ReLU
        h2 = jnp.dot(h1.astype(jnp.bfloat16), w2_ref[...],
                     preferred_element_type=jnp.float32)
        h2 = jnp.maximum(h2 + b2_ref[...], 0.0)
        h_ref[i] = h2.astype(jnp.bfloat16)

    # Linear3 (this out_dim tile) + Tanh
    o = jnp.dot(h_ref[i], w3_ref[...], preferred_element_type=jnp.float32)
    o_ref[...] = jnp.tanh(o + b3_ref[...]).astype(o_ref.dtype)


# --------------------------------------------------------------------------
# Tiling plan / folding (run ONCE, outside the per-call path)
# --------------------------------------------------------------------------
def _plan_out_tiling(out_dim, hidden):
    """Pick the out_dim tile width tn and the padded output width."""
    out_128 = pl.cdiv(out_dim, 128) * 128
    # Single lane-dense tile if the double-buffered bf16 w3 tile stays small;
    # otherwise fall back to 512-wide tiles.
    if 2 * 2 * hidden * out_128 <= 8 * 1024 * 1024:
        tn = out_128
    else:
        tn = 512
    out_pad = pl.cdiv(out_128, tn) * tn
    return tn, out_pad


def fold_params(params, img_size):
    """Fold BatchNorm (running stats) into the linears, cast weights to bf16,
    and pre-pad w3/b3 to the lane-dense output width.  Call ONCE per model,
    not per forward call."""
    hidden = params["w1"].shape[1]
    out_dim = img_size * img_size
    _, out_pad = _plan_out_tiling(out_dim, hidden)

    s1 = params["g1"] * jax.lax.rsqrt(params["v1"] + BN_EPS)
    w1f = (params["w1"] * s1).astype(jnp.bfloat16)
    b1f = ((params["b1"] - params["m1"]) * s1 + params["be1"]).astype(jnp.float32)

    s2 = params["g2"] * jax.lax.rsqrt(params["v2"] + BN_EPS)
    w2f = (params["w2"] * s2).astype(jnp.bfloat16)
    b2f = ((params["b2"] - params["m2"]) * s2 + params["be2"]).astype(jnp.float32)

    w3f = params["w3"].astype(jnp.bfloat16)
    b3f = params["b3"].astype(jnp.float32)
    if out_pad != out_dim:
        w3f = jnp.pad(w3f, ((0, 0), (0, out_pad - out_dim)))
        b3f = jnp.pad(b3f, ((0, 0), (0, out_pad - out_dim)))

    return {"w1": w1f, "b1": b1f, "w2": w2f, "b2": b2f, "w3": w3f, "b3": b3f}


def _vmem_capacity_bytes():
    try:
        return int(pltpu.get_tpu_info().vmem_capacity_bytes)
    except Exception:
        return 64 * 1024 * 1024   # conservative: v7x per-core VMEM


# --------------------------------------------------------------------------
# Wrapper
# --------------------------------------------------------------------------
def generator_forward(fmri_data, folded, img_size):
    """Generator forward pass. fmri_data: (B, fmri_dim) f32 (or bf16);
    `folded` is the output of fold_params()."""
    B, fmri_dim = fmri_data.shape
    hidden = folded["w1"].shape[1]
    out_dim = img_size * img_size
    tn, out_pad = _plan_out_tiling(out_dim, hidden)
    assert folded["w3"].shape == (hidden, out_pad), (folded["w3"].shape, out_pad)

    # ---- batch tiling: one tile when small (no w3 re-streaming even without
    # ---- the grid swap), capped at 256 rows (MXU-friendly M) otherwise.
    B_pad = pl.cdiv(B, 8) * 8
    if B_pad <= 256:
        tb = B_pad
    else:
        tb = 256
        B_pad = pl.cdiv(B, tb) * tb
    ni = B_pad // tb
    nj = out_pad // tn
    grid = (nj, ni)   # out_dim tiles OUTER, batch tiles INNER (see kernel doc)

    # ---- inputs: bf16 x, zero-padded batch rows (sliced off afterwards).
    x = fmri_data.astype(jnp.bfloat16)
    if B_pad != B:
        x = jnp.pad(x, ((0, B_pad - B), (0, 0)))

    in_specs = [
        pl.BlockSpec((tb, fmri_dim), lambda j, i: (i, 0)),       # x (bf16)
        pl.BlockSpec((fmri_dim, hidden), lambda j, i: (0, 0)),   # w1 (BN folded)
        pl.BlockSpec((1, hidden), lambda j, i: (0, 0)),          # b1 (BN folded)
        pl.BlockSpec((hidden, hidden), lambda j, i: (0, 0)),     # w2 (BN folded)
        pl.BlockSpec((1, hidden), lambda j, i: (0, 0)),          # b2 (BN folded)
        pl.BlockSpec((hidden, tn), lambda j, i: (0, j)),         # w3 tile (const over i)
        pl.BlockSpec((1, tn), lambda j, i: (0, j)),              # b3 tile
    ]
    out_spec = pl.BlockSpec((tb, tn), lambda j, i: (i, j))

    # ---- VMEM budget (double-buffered tiles + persistent hidden scratch),
    # ---- clamped to the actual generation's physical VMEM.
    tile_bytes = (
        2 * 2 * tb * fmri_dim                      # x tile (bf16), 2 bufs
        + 2 * 2 * fmri_dim * hidden                # w1 (bf16), 2 bufs
        + 2 * 2 * hidden * hidden                  # w2 (bf16), 2 bufs
        + 2 * 2 * hidden * tn                      # w3 tile (bf16), 2 bufs
        + 2 * 4 * (2 * hidden + tn)                # f32 biases, 2 bufs
        + 2 * 4 * tb * tn                          # f32 out tile, 2 bufs
        + ni * tb * hidden * 2                     # bf16 hidden scratch (1 copy)
    )
    vmem_limit = int(min(_vmem_capacity_bytes(),
                         max(32 * 1024 * 1024, 2 * tile_bytes)))

    cost = pl.CostEstimate(
        flops=2 * B_pad * (fmri_dim * hidden + hidden * hidden + hidden * out_pad),
        transcendentals=B_pad * out_pad,
        bytes_accessed=(
            2 * (fmri_dim * hidden + hidden * hidden + hidden * out_pad)  # bf16 weights (once)
            + 2 * B_pad * fmri_dim * nj                                   # bf16 x (re-fetched per j)
            + 4 * (2 * hidden + out_pad)                                  # f32 biases
            + 4 * B_pad * out_pad                                         # f32 output
        ),
    )

    flat = pl.pallas_call(
        _generator_kernel,
        out_shape=jax.ShapeDtypeStruct((B_pad, out_pad), jnp.float32),
        grid_spec=pltpu.PrefetchScalarGridSpec(
            num_scalar_prefetch=0,
            grid=grid,
            in_specs=in_specs,
            out_specs=out_spec,
            scratch_shapes=[pltpu.VMEM((ni, tb, hidden), jnp.bfloat16)],
        ),
        compiler_params=pltpu.CompilerParams(
            # Both axes sequential: the hidden-activation scratch is written at
            # j == 0 and carried across the whole grid, so neither axis may be
            # megacore-sharded without revisiting the caching scheme.
            dimension_semantics=("arbitrary", "arbitrary"),
            vmem_limit_bytes=vmem_limit,
        ),
        cost_estimate=cost,
    )(x, folded["w1"], folded["b1"], folded["w2"], folded["b2"],
      folded["w3"], folded["b3"])

    # Drop batch/lane padding, then view(B, 1, H, W) (NCHW) like PyTorch.
    return flat[:B, :out_dim].reshape(B, 1, img_size, img_size)


# --------------------------------------------------------------------------
# Pure-JAX reference + synthetic params
# --------------------------------------------------------------------------
def _reference_forward(fmri, p, img_size):
    """f32 reference (inference-mode BN, dropout = identity)."""
    def bn(h, g, be, m, v):
        return (h - m) * jax.lax.rsqrt(v + BN_EPS) * g + be

    h = jnp.maximum(bn(fmri @ p["w1"] + p["b1"], p["g1"], p["be1"], p["m1"], p["v1"]), 0.0)
    h = jnp.maximum(bn(h @ p["w2"] + p["b2"], p["g2"], p["be2"], p["m2"], p["v2"]), 0.0)
    o = jnp.tanh(h @ p["w3"] + p["b3"])
    return o.reshape(fmri.shape[0], 1, img_size, img_size)


def init_params(key, fmri_dim, hidden_dim, img_size):
    """Deterministic synthetic parameter initialization (f32 master copy)."""
    out_dim = img_size * img_size
    ks = jax.random.split(key, 12)

    def lin(kw, kb, fan_in, fan_out):
        lim = 1.0 / jnp.sqrt(fan_in)
        w = jax.random.uniform(kw, (fan_in, fan_out), jnp.float32, -lim, lim)
        b = jax.random.uniform(kb, (1, fan_out), jnp.float32, -lim, lim)
        return w, b

    w1, b1 = lin(ks[0], ks[1], fmri_dim, hidden_dim)
    w2, b2 = lin(ks[2], ks[3], hidden_dim, hidden_dim)
    w3, b3 = lin(ks[4], ks[5], hidden_dim, out_dim)

    g1 = 1.0 + 0.1 * jax.random.normal(ks[6], (1, hidden_dim), jnp.float32)
    be1 = 0.1 * jax.random.normal(ks[7], (1, hidden_dim), jnp.float32)
    m1 = 0.05 * jax.random.normal(ks[8], (1, hidden_dim), jnp.float32)
    v1 = jax.random.uniform(ks[9], (1, hidden_dim), jnp.float32, 0.5, 1.5)
    g2 = 1.0 + 0.1 * jax.random.normal(ks[10], (1, hidden_dim), jnp.float32)
    be2 = 0.1 * jax.random.normal(ks[11], (1, hidden_dim), jnp.float32)
    m2 = jnp.zeros((1, hidden_dim), jnp.float32)
    v2 = jnp.ones((1, hidden_dim), jnp.float32)

    return {
        "w1": w1, "b1": b1, "g1": g1, "be1": be1, "m1": m1, "v1": v1,
        "w2": w2, "b2": b2, "g2": g2, "be2": be2, "m2": m2, "v2": v2,
        "w3": w3, "b3": b3,
    }


if __name__ == "__main__":
    # Small shapes consistent with the module (default img_size=28).
    # out_dim = 784 -> padded to a single 896-wide lane-dense tile; B=16 fits
    # in one batch tile -> single grid point (no per-step overhead).
    B, FMRI_DIM, HIDDEN, IMG = 16, 128, 64, 28

    key = jax.random.PRNGKey(0)
    k_param, k_x = jax.random.split(key)
    params = init_params(k_param, FMRI_DIM, HIDDEN, IMG)
    fmri = jax.random.normal(k_x, (B, FMRI_DIM), jnp.float32)

    # Fold BN / cast / pad ONCE (outside the per-call hot path).
    folded = jax.block_until_ready(fold_params(params, IMG))

    img = generator_forward(fmri, folded, IMG)
    img = jax.block_until_ready(img)

    assert img.shape == (B, 1, IMG, IMG), img.shape
    assert bool(jnp.all(jnp.isfinite(img)))
    assert bool(jnp.all(jnp.abs(img) <= 1.0 + 1e-6))   # tanh range

    ref = _reference_forward(fmri, params, IMG)
    err = float(jnp.max(jnp.abs(img - ref)))
    assert err < 5e-2, f"max abs err vs f32 reference = {err}"
    print("KERNEL_OK")
</pallas_src>

<mosaic_0001>
module attributes {stable_mosaic.version = 11 : i64} {
  func.func @_generator_kernel(%arg0: i32, %arg1: i32, %arg2: memref<16x128xbf16, #tpu.memory_space<vmem>>, %arg3: memref<128x64xbf16, #tpu.memory_space<vmem>>, %arg4: memref<1x64xf32, #tpu.memory_space<vmem>>, %arg5: memref<64x64xbf16, #tpu.memory_space<vmem>>, %arg6: memref<1x64xf32, #tpu.memory_space<vmem>>, %arg7: memref<64x896xbf16, #tpu.memory_space<vmem>>, %arg8: memref<1x896xf32, #tpu.memory_space<vmem>>, %arg9: memref<16x896xf32, #tpu.memory_space<vmem>>, %arg10: memref<1x16x64xbf16, #tpu.memory_space<vmem>>) attributes {dimension_semantics = [#tpu.dimension_semantics<arbitrary>, #tpu.dimension_semantics<arbitrary>], iteration_bounds = array<i64: 1, 1>, scalar_prefetch = 0 : i64, scratch_operands = 1 : i64, tpu.core_type = #tpu.core_type<tc>, window_params = [{transform_indices = @transform_0, window_bounds = array<i64: 16, 128>}, {pipeline_mode = #tpu.pipeline_mode<synchronous>, transform_indices = @transform_1, window_bounds = array<i64: 128, 64>}, {pipeline_mode = #tpu.pipeline_mode<synchronous>, transform_indices = @transform_2, window_bounds = array<i64: 1, 64>}, {pipeline_mode = #tpu.pipeline_mode<synchronous>, transform_indices = @transform_3, window_bounds = array<i64: 64, 64>}, {pipeline_mode = #tpu.pipeline_mode<synchronous>, transform_indices = @transform_4, window_bounds = array<i64: 1, 64>}, {transform_indices = @transform_5, window_bounds = array<i64: 64, 896>}, {transform_indices = @transform_6, window_bounds = array<i64: 1, 896>}, {transform_indices = @transform_7, window_bounds = array<i64: 16, 896>}]} {
    %c0_i32 = arith.constant 0 : i32
    %0 = arith.cmpi eq, %arg0, %c0_i32 : i32
    %1 = arith.extui %0 : i1 to i32
    %c0_i32_0 = arith.constant 0 : i32
    %2 = arith.cmpi ne, %1, %c0_i32_0 : i32
    scf.if %2 {
      %c0_8 = arith.constant 0 : index
      %c0_9 = arith.constant 0 : index
      %13 = vector.load %arg2[%c0_8, %c0_9] : memref<16x128xbf16, #tpu.memory_space<vmem>>, vector<16x128xbf16>
      %c0_10 = arith.constant 0 : index
      %c0_11 = arith.constant 0 : index
      %14 = vector.load %arg3[%c0_10, %c0_11] : memref<128x64xbf16, #tpu.memory_space<vmem>>, vector<128x64xbf16>
      %cst_12 = arith.constant dense<0.000000e+00> : vector<16x64xf32>
      %15 = tpu.matmul %13, %14, %cst_12 {dimension_numbers = #tpu.dot_dimension_numbers<[1], [0], [0], [1], [0, 0, 1, 1], [], []>} : vector<16x128xbf16>, vector<128x64xbf16>, vector<16x64xf32> -> vector<16x64xf32>
      %c0_13 = arith.constant 0 : index
      %c0_14 = arith.constant 0 : index
      %16 = vector.load %arg4[%c0_13, %c0_14] : memref<1x64xf32, #tpu.memory_space<vmem>>, vector<1x64xf32>
      %17 = vector.broadcast %16 : vector<1x64xf32> to vector<16x64xf32>
      %18 = arith.addf %15, %17 : vector<16x64xf32>
      %cst_15 = arith.constant 0.000000e+00 : f32
      %19 = vector.broadcast %cst_15 : f32 to vector<16x64xf32>
      %20 = arith.maximumf %18, %19 : vector<16x64xf32>
      %21 = arith.truncf %20 : vector<16x64xf32> to vector<16x64xbf16>
      %c0_16 = arith.constant 0 : index
      %c0_17 = arith.constant 0 : index
      %22 = vector.load %arg5[%c0_16, %c0_17] : memref<64x64xbf16, #tpu.memory_space<vmem>>, vector<64x64xbf16>
      %cst_18 = arith.constant dense<0.000000e+00> : vector<16x64xf32>
      %23 = tpu.matmul %21, %22, %cst_18 {dimension_numbers = #tpu.dot_dimension_numbers<[1], [0], [0], [1], [0, 0, 1, 1], [], []>} : vector<16x64xbf16>, vector<64x64xbf16>, vector<16x64xf32> -> vector<16x64xf32>
      %c0_19 = arith.constant 0 : index
      %c0_20 = arith.constant 0 : index
      %24 = vector.load %arg6[%c0_19, %c0_20] : memref<1x64xf32, #tpu.memory_space<vmem>>, vector<1x64xf32>
      %25 = vector.broadcast %24 : vector<1x64xf32> to vector<16x64xf32>
      %26 = arith.addf %23, %25 : vector<16x64xf32>
      %cst_21 = arith.constant 0.000000e+00 : f32
      %27 = vector.broadcast %cst_21 : f32 to vector<16x64xf32>
      %28 = arith.maximumf %26, %27 : vector<16x64xf32>
      %29 = arith.truncf %28 : vector<16x64xf32> to vector<16x64xbf16>
      %30 = arith.index_cast %arg1 : i32 to index
      %c0_22 = arith.constant 0 : index
      %c0_23 = arith.constant 0 : index
      %31 = vector.load %arg10[%30, %c0_22, %c0_23] : memref<1x16x64xbf16, #tpu.memory_space<vmem>>, vector<1x16x64xbf16>
      %32 = vector.shape_cast %31 : vector<1x16x64xbf16> to vector<16x64xbf16>
      %33 = vector.shape_cast %29 : vector<16x64xbf16> to vector<1x16x64xbf16>
      tpu.vector_store %arg10[%30, %c0_22, %c0_23], %33 {strides = array<i32>} : memref<1x16x64xbf16, #tpu.memory_space<vmem>>, vector<1x16x64xbf16>,
    } else {
    }
    %3 = arith.index_cast %arg1 : i32 to index
    %c0 = arith.constant 0 : index
    %c0_1 = arith.constant 0 : index
    %4 = vector.load %arg10[%3, %c0, %c0_1] : memref<1x16x64xbf16, #tpu.memory_space<vmem>>, vector<1x16x64xbf16>
    %5 = vector.shape_cast %4 : vector<1x16x64xbf16> to vector<16x64xbf16>
    %c0_2 = arith.constant 0 : index
    %c0_3 = arith.constant 0 : index
    %6 = vector.load %arg7[%c0_2, %c0_3] : memref<64x896xbf16, #tpu.memory_space<vmem>>, vector<64x896xbf16>
    %cst = arith.constant dense<0.000000e+00> : vector<16x896xf32>
    %7 = tpu.matmul %5, %6, %cst {dimension_numbers = #tpu.dot_dimension_numbers<[1], [0], [0], [1], [0, 0, 1, 1], [], []>} : vector<16x64xbf16>, vector<64x896xbf16>, vector<16x896xf32> -> vector<16x896xf32>
    %c0_4 = arith.constant 0 : index
    %c0_5 = arith.constant 0 : index
    %8 = vector.load %arg8[%c0_4, %c0_5] : memref<1x896xf32, #tpu.memory_space<vmem>>, vector<1x896xf32>
    %9 = vector.broadcast %8 : vector<1x896xf32> to vector<16x896xf32>
    %10 = arith.addf %7, %9 : vector<16x896xf32>
    %11 = math.tanh %10 : vector<16x896xf32>
    %c0_6 = arith.constant 0 : index
    %c0_7 = arith.constant 0 : index
    %12 = vector.load %arg9[%c0_6, %c0_7] : memref<16x896xf32, #tpu.memory_space<vmem>>, vector<16x896xf32>
    tpu.vector_store %arg9[%c0_6, %c0_7], %11 {strides = array<i32>} : memref<16x896xf32, #tpu.memory_space<vmem>>, vector<16x896xf32>,
    return
  }
  func.func @transform_0(%arg0: i32, %arg1: i32) -> (i32, i32) {
    %c0_i32 = arith.constant 0 : i32
    %c0_i32_0 = arith.constant 0 : i32
    return %arg1, %c0_i32 : i32, i32
  }
  func.func @transform_1(%arg0: i32, %arg1: i32) -> (i32, i32) {
    %c0_i32 = arith.constant 0 : i32
    %c0_i32_0 = arith.constant 0 : i32
    %c0_i32_1 = arith.constant 0 : i32
    return %c0_i32, %c0_i32_0 : i32, i32
  }
  func.func @transform_2(%arg0: i32, %arg1: i32) -> (i32, i32) {
    %c0_i32 = arith.constant 0 : i32
    %c0_i32_0 = arith.constant 0 : i32
    %c0_i32_1 = arith.constant 0 : i32
    return %c0_i32, %c0_i32_0 : i32, i32
  }
  func.func @transform_3(%arg0: i32, %arg1: i32) -> (i32, i32) {
    %c0_i32 = arith.constant 0 : i32
    %c0_i32_0 = arith.constant 0 : i32
    %c0_i32_1 = arith.constant 0 : i32
    return %c0_i32, %c0_i32_0 : i32, i32
  }
  func.func @transform_4(%arg0: i32, %arg1: i32) -> (i32, i32) {
    %c0_i32 = arith.constant 0 : i32
    %c0_i32_0 = arith.constant 0 : i32
    %c0_i32_1 = arith.constant 0 : i32
    return %c0_i32, %c0_i32_0 : i32, i32
  }
  func.func @transform_5(%arg0: i32, %arg1: i32) -> (i32, i32) {
    %c0_i32 = arith.constant 0 : i32
    %c0_i32_0 = arith.constant 0 : i32
    return %c0_i32, %arg0 : i32, i32
  }
  func.func @transform_6(%arg0: i32, %arg1: i32) -> (i32, i32) {
    %c0_i32 = arith.constant 0 : i32
    %c0_i32_0 = arith.constant 0 : i32
    return %c0_i32, %arg0 : i32, i32
  }
  func.func @transform_7(%arg0: i32, %arg1: i32) -> (i32, i32) {
    %c0_i32 = arith.constant 0 : i32
    return %arg1, %arg0 : i32, i32
  }
}

</mosaic_0001>

<llo_original>
// kernel: tpu_custom_call.1
$region0: #{tpu_custom_call.1}
  #allocation0 [shape = 'u32[]', space=smem, size = 0x4, offset = 0x4, fixed_abs, tag = 'smem constant byte address 0x4 - core index']
  #allocation1 [shape = 'u32[144,128]{1,0:T(1,128)}', space=vmem, size = 0x12000, scoped, tag = 'internal scratch']
  #allocation2 [shape = 'bf16[1,16,64]{2,1,0:T(16,128)(2,1)}', space=vmem, size = 0x1000, scoped, tag = 'scratch operand']
  %s0 = inlined_call_operand.vmem [shape: bf16[16,128], index: 0, kind: input, shape index: {}]
  %s1 = inlined_call_operand.vmem [shape: bf16[128,64], index: 1, kind: input, shape index: {}]
  %s2 = inlined_call_operand.vmem [shape: f32[1,64], index: 2, kind: input, shape index: {}]
  %s3 = inlined_call_operand.vmem [shape: bf16[64,64], index: 3, kind: input, shape index: {}]
  %s4 = inlined_call_operand.vmem [shape: f32[1,64], index: 4, kind: input, shape index: {}]
  %s5 = inlined_call_operand.hbm [shape: bf16[64,896], index: 5, kind: input, shape index: {}]
  %s6 = inlined_call_operand.vmem [shape: f32[1,896], index: 6, kind: input, shape index: {}]
  %s7 = inlined_call_operand.hbm [shape: f32[16,896], index: 7, kind: output, shape index: {}]
  %s8 = sld [smem:[#allocation0]]
  $region46: #{tpu_custom_call.1} parent=0
    _
  %s10 = ssub.s32 1, %s8
  %s11 = scalar_select 0, %s10, %s8
  $region1: #{tpu_custom_call.1} parent=0
    #allocation3 [shape = 'u8[114688]{0}', space=vmem, size = 0x1c000, scoped, tag = 'input window, operand 5, single buffered']
    #allocation4 [shape = 's32[1]{0}', space=sflag, size = 0x4, scoped, tag = 'scoped memory for tpu_custom_call.1']
    #allocation5 [shape = 's32[1]{0}', space=sflag, size = 0x4, scoped, tag = 'scoped memory for tpu_custom_call.1']
    #allocation6 [shape = 'u8[57344]{0}', space=vmem, size = 0xe000, scoped, tag = 'output window, operand 0, single buffered']
    %12 = vsyncpa [#allocation4], 0
    %13 = vsyncpa [#allocation5], 0
    // Predicated region
    $region2: #{tpu_custom_call.1} parent=1 // pred_check
      _
    $region3: #{tpu_custom_call.1} parent=1 // pred_check_branch
      %15 = sbr.rel (0) target = $region5
    $region4: #{tpu_custom_call.1} parent=1 // pred_region
      _
    $region5: #{tpu_custom_call.1} parent=1 // pred_fallthru
      _
    // Predicated region
    $region6: #{tpu_custom_call.1} parent=1 // pred_check
      _
    $region7: #{tpu_custom_call.1} parent=1 // pred_check_branch
      %17 = sbr.rel (0) target = $region9
    $region8: #{tpu_custom_call.1} parent=1 // pred_region
      _
    $region9: #{tpu_custom_call.1} parent=1 // pred_fallthru
      _
    // Predicated region
    $region10: #{tpu_custom_call.1} parent=1 // pred_check
      _
    $region11: #{tpu_custom_call.1} parent=1 // pred_check_branch
      %19 = sbr.rel (0) target = $region13
    $region12: #{tpu_custom_call.1} parent=1 // pred_region
      _
    $region13: #{tpu_custom_call.1} parent=1 // pred_fallthru
      _
    // Predicated region
    $region14: #{tpu_custom_call.1} parent=1 // pred_check
      _
    $region15: #{tpu_custom_call.1} parent=1 // pred_check_branch
      %21 = sbr.rel (0) target = $region17
    $region16: #{tpu_custom_call.1} parent=1 // pred_region
      _
    $region17: #{tpu_custom_call.1} parent=1 // pred_fallthru
      _
    // Predicated region
    $region18: #{tpu_custom_call.1} parent=1 // pred_check
      _
    $region19: #{tpu_custom_call.1} parent=1 // pred_check_branch
      %23 = sbr.rel (0) target = $region21
    $region20: #{tpu_custom_call.1} parent=1 // pred_region
      _
    $region21: #{tpu_custom_call.1} parent=1 // pred_fallthru
      _
    // Predicated region
    $region22: #{tpu_custom_call.1} parent=1 // pred_check
      _
    $region23: #{tpu_custom_call.1} parent=1 // pred_check_branch
      %25 = sbr.rel (0) target = $region25
    $region24: #{tpu_custom_call.1} parent=1 // pred_region
      %s27 = ssub.s32 3584, 3584
      %28 = vsyncadd [#allocation4], %s27
      %s29 = sshll.u32 [#allocation3], 4
      %s30 = int_to_ptr.vmem [resolvable:$true] %s29
      %35 = dma.hbm_to_vmem [thread:$0]  %s5, 3584, %s30, [#allocation4], 448, 448, 28
    $region25: #{tpu_custom_call.1} parent=1 // pred_fallthru
      _
    // Predicated region
    $region26: #{tpu_custom_call.1} parent=1 // pred_check
      _
    $region27: #{tpu_custom_call.1} parent=1 // pred_check_branch
      %37 = sbr.rel (0) target = $region29
    $region28: #{tpu_custom_call.1} parent=1 // pred_region
      _
    $region29: #{tpu_custom_call.1} parent=1 // pred_fallthru
      _
    // Predicated region
    $region30: #{tpu_custom_call.1} parent=1 // pred_check
      _
    $region31: #{tpu_custom_call.1} parent=1 // pred_check_branch
      %39 = sbr.rel (0) target = $region33
    $region32: #{tpu_custom_call.1} parent=1 // pred_region
      %40 = dma.done [#allocation4], 3584
    $region33: #{tpu_custom_call.1} parent=1 // pred_fallthru
      _
    %p42 = scmp.eq.s32.totalorder 0, 0
    // Predicated region
    $region34: #{tpu_custom_call.1} parent=1 // pred_check
      %p43 = pneg %p42
    $region35: #{tpu_custom_call.1} parent=1 // pred_check_branch
      %45 = sbr.rel (%p43) target = $region37
    $region36: #{tpu_custom_call.1} parent=1 // pred_region
      %v46 = vld [vmem:[%s0] sm:$0xf]
      %v47 = vld [vmem:[%s0 + $0x4] sm:$0xf]
      %v48 = vld [vmem:[%s1] sm:$0xf]
      %v49 = vld [vmem:[%s1 + $0x4] sm:$0xf]
      %v50 = vld [vmem:[%s1 + $0x8] sm:$0xf]
      %v51 = vld [vmem:[%s1 + $0xc] sm:$0xf]
      %v52 = vld [vmem:[%s1 + $0x10] sm:$0xf]
      %v53 = vld [vmem:[%s1 + $0x14] sm:$0xf]
      %v54 = vld [vmem:[%s1 + $0x18] sm:$0xf]
      %v55 = vld [vmem:[%s1 + $0x1c] sm:$0xf]
      %v56 = vld [vmem:[%s1 + $0x20] sm:$0xf]
      %v57 = vld [vmem:[%s1 + $0x24] sm:$0xf]
      %v58 = vld [vmem:[%s1 + $0x28] sm:$0xf]
      %v59 = vld [vmem:[%s1 + $0x2c] sm:$0xf]
      %v60 = vld [vmem:[%s1 + $0x30] sm:$0xf]
      %v61 = vld [vmem:[%s1 + $0x34] sm:$0xf]
      %v62 = vld [vmem:[%s1 + $0x38] sm:$0xf]
      %v63 = vld [vmem:[%s1 + $0x3c] sm:$0xf]
      %v64 = vld [vmem:[%s2] sm:$0x1]
      %v66 = vlaneseq
      %v67 = vshrl.u32 %v66, 7
      %v68 = vsub.s32 0, %v67
      %v69 = vrot.slane %v64, %v68
      %v73 = vunpack.c.l.b16 %v46
      %v74 = vunpack.c.l.b16 %v47
      %v75 = vpack.c.b16 %v74, %v73
      %v93 = vunpack.c.l.b16 %v48
      %v94 = vunpack.c.l.b16 %v49
      %v95 = vunpack.c.l.b16 %v50
      %v96 = vunpack.c.l.b16 %v51
      %v97 = vunpack.c.l.b16 %v52
      %v98 = vunpack.c.l.b16 %v53
      %v99 = vunpack.c.l.b16 %v54
      %v100 = vunpack.c.l.b16 %v55
      %v101 = vunpack.c.l.b16 %v56
      %v102 = vunpack.c.l.b16 %v57
      %v103 = vunpack.c.l.b16 %v58
      %v104 = vunpack.c.l.b16 %v59
      %v105 = vunpack.c.l.b16 %v60
      %v106 = vunpack.c.l.b16 %v61
      %v107 = vunpack.c.l.b16 %v62
      %v108 = vunpack.c.l.b16 %v63
      %v109 = vpack.c.b16 %v94, %v93
      %v110 = vpack.c.b16 %v96, %v95
      %v111 = vpack.c.b16 %v98, %v97
      %v112 = vpack.c.b16 %v100, %v99
      %v113 = vpack.c.b16 %v102, %v101
      %v114 = vpack.c.b16 %v104, %v103
      %v115 = vpack.c.b16 %v106, %v105
      %v116 = vpack.c.b16 %v108, %v107
      %125 = vmatprep.subr.bf16.mxu0 0
      %126 = vmatpush1.bf16.msra.mxu0 %v109
      %127 = vmatprep.subr.bf16.mxu0 0
      %128 = vmatpush1.bf16.msra.mxu0 %v110
      %129 = vmatprep.subr.bf16.mxu0 0
      %130 = vmatpush1.bf16.msra.mxu0 %v111
      %131 = vmatprep.subr.bf16.mxu0 0
      %132 = vmatpush1.bf16.msra.mxu0 %v112
      %133 = vmatprep.subr.bf16.mxu0 0
      %134 = vmatpush1.bf16.msra.mxu0 %v113
      %135 = vmatprep.subr.bf16.mxu0 0
      %136 = vmatpush1.bf16.msra.mxu0 %v114
      %137 = vmatprep.subr.bf16.mxu0 0
      %138 = vmatpush1.bf16.msra.mxu0 %v115
      %139 = vmatprep.subr.bf16.mxu0 0
      %140 = vmatpush1.bf16.msra.mxu0 %v116
      %141 = vmatprep.subr.bf16.mxu0 0
      %142 = vmatpush1.bf16.msra.mxu0 0
      %143 = vmatprep.subr.bf16.mxu0 0
      %144 = vmatpush1.bf16.msra.mxu0 0
      %145 = vmatprep.subr.bf16.mxu0 0
      %146 = vmatpush1.bf16.msra.mxu0 0
      %147 = vmatprep.subr.bf16.mxu0 0
      %148 = vmatpush1.bf16.msra.mxu0 0
      %149 = vmatprep.subr.bf16.mxu0 0
      %150 = vmatpush1.bf16.msra.mxu0 0
      %151 = vmatprep.subr.bf16.mxu0 0
      %152 = vmatpush1.bf16.msra.mxu0 0
      %153 = vmatprep.subr.bf16.mxu0 0
      %154 = vmatpush1.bf16.msra.mxu0 0
      %155 = vmatprep.subr.bf16.mxu0 0
      %156 = vmatpush1.bf16.msra.mxu0 0
      %157 = vmatprep.mubr.bf16.mxu0 0
      %158 = vmatmul.mubr.bf16.gmra.mrb[0].mxu0 %v75
      %v159 = vpop.f32.mrb[0].mxu0
      %v160 = vadd.f32 %v69, %v159
      %v161 = vpop.f32.mrb[0].mxu0
      %v162 = vpop.f32.mrb[0].mxu0
      %v163 = vadd.f32 %v69, %v162
      %v164 = vpop.f32.mrb[0].mxu0
      %165 = vdwg.mxu0
      %v166 = vmax.f32 %v160, 0.0
      %v167 = vmax.f32 %v163, 0.0
      %v168 = vpack.c.bf16 %v167, %v166
      %v169 = vld [vmem:[%s3] sm:$0xf]
      %v170 = vld [vmem:[%s3 + $0x4] sm:$0xf]
      %v171 = vld [vmem:[%s3 + $0x8] sm:$0xf]
      %v172 = vld [vmem:[%s3 + $0xc] sm:$0xf]
      %v173 = vld [vmem:[%s3 + $0x10] sm:$0xf]
      %v174 = vld [vmem:[%s3 + $0x14] sm:$0xf]
      %v175 = vld [vmem:[%s3 + $0x18] sm:$0xf]
      %v176 = vld [vmem:[%s3 + $0x1c] sm:$0xf]
      %v177 = vld [vmem:[%s4] sm:$0x1]
      %v179 = vlaneseq
      %v180 = vshrl.u32 %v179, 7
      %v181 = vsub.s32 0, %v180
      %v182 = vrot.slane %v177, %v181
      %v192 = vunpack.c.l.b16 %v169
      %v193 = vunpack.c.l.b16 %v170
      %v194 = vunpack.c.l.b16 %v171
      %v195 = vunpack.c.l.b16 %v172
      %v196 = vunpack.c.l.b16 %v173
      %v197 = vunpack.c.l.b16 %v174
      %v198 = vunpack.c.l.b16 %v175
      %v199 = vunpack.c.l.b16 %v176
      %v200 = vpack.c.b16 %v193, %v192
      %v201 = vpack.c.b16 %v195, %v194
      %v202 = vpack.c.b16 %v197, %v196
      %v203 = vpack.c.b16 %v199, %v198
      %vm208 = vcmask 523264
      %v210 = vsel %vm208, %v168, 0
      %212 = vmatprep.subr.bf16.mxu0 0
      %213 = vmatpush1.bf16.msra.mxu0 %v200
      %214 = vmatprep.subr.bf16.mxu0 0
      %215 = vmatpush1.bf16.msra.mxu0 %v201
      %216 = vmatprep.subr.bf16.mxu0 0
      %217 = vmatpush1.bf16.msra.mxu0 %v202
      %218 = vmatprep.subr.bf16.mxu0 0
      %219 = vmatpush1.bf16.msra.mxu0 %v203
      %220 = vmatprep.subr.bf16.mxu0 0
      %221 = vmatpush1.bf16.msra.mxu0 0
      %222 = vmatprep.subr.bf16.mxu0 0
      %223 = vmatpush1.bf16.msra.mxu0 0
      %224 = vmatprep.subr.bf16.mxu0 0
      %225 = vmatpush1.bf16.msra.mxu0 0
      %226 = vmatprep.subr.bf16.mxu0 0
      %227 = vmatpush1.bf16.msra.mxu0 0
      %228 = vmatprep.subr.bf16.mxu0 0
      %229 = vmatpush1.bf16.msra.mxu0 0
      %230 = vmatprep.subr.bf16.mxu0 0
      %231 = vmatpush1.bf16.msra.mxu0 0
      %232 = vmatprep.subr.bf16.mxu0 0
      %233 = vmatpush1.bf16.msra.mxu0 0
      %234 = vmatprep.subr.bf16.mxu0 0
      %235 = vmatpush1.bf16.msra.mxu0 0
      %236 = vmatprep.subr.bf16.mxu0 0
      %237 = vmatpush1.bf16.msra.mxu0 0
      %238 = vmatprep.subr.bf16.mxu0 0
      %239 = vmatpush1.bf16.msra.mxu0 0
      %240 = vmatprep.subr.bf16.mxu0 0
      %241 = vmatpush1.bf16.msra.mxu0 0
      %242 = vmatprep.subr.bf16.mxu0 0
      %243 = vmatpush1.bf16.msra.mxu0 0
      %244 = vmatprep.mubr.bf16.mxu0 0
      %245 = vmatmul.mubr.bf16.gmra.mrb[0].mxu0 %v210
      %v246 = vpop.f32.mrb[0].mxu0
      %v247 = vadd.f32 %v182, %v246
      %v248 = vpop.f32.mrb[0].mxu0
      %v249 = vpop.f32.mrb[0].mxu0
      %v250 = vadd.f32 %v182, %v249
      %v251 = vpop.f32.mrb[0].mxu0
      %252 = vdwg.mxu0
      %v253 = vmax.f32 %v247, 0.0
      %v254 = vmax.f32 %v250, 0.0
      %v255 = vpack.c.bf16 %v254, %v253
      %256 = vst.msk [vmem:[#allocation2] sm:$0xff] %vm208, %v255
    $region37: #{tpu_custom_call.1} parent=1 // pred_fallthru
      _
    %v257 = vld [vmem:[#allocation2] sm:$0xff]
    %v258 = vld [vmem:[#allocation3] sm:$0xff]
    %v259 = vld [vmem:[#allocation3 + $0x8] sm:$0xff]
    %v260 = vld [vmem:[#allocation3 + $0x10] sm:$0xff]
    %v261 = vld [vmem:[#allocation3 + $0x18] sm:$0xf]
    %v262 = vld [vmem:[#allocation3 + $0x1c] sm:$0xff]
    %v263 = vld [vmem:[#allocation3 + $0x24] sm:$0xff]
    %v264 = vld [vmem:[#allocation3 + $0x2c] sm:$0xff]
    %v265 = vld [vmem:[#allocation3 + $0x34] sm:$0xf]
    %v266 = vld [vmem:[#allocation3 + $0x38] sm:$0xff]
    %v267 = vld [vmem:[#allocation3 + $0x40] sm:$0xff]
    %v268 = vld [vmem:[#allocation3 + $0x48] sm:$0xff]
    %v269 = vld [vmem:[#allocation3 + $0x50] sm:$0xf]
    %v270 = vld [vmem:[#allocation3 + $0x54] sm:$0xff]
    %v271 = vld [vmem:[#allocation3 + $0x5c] sm:$0xff]
    %v272 = vld [vmem:[#allocation3 + $0x64] sm:$0xff]
    %v273 = vld [vmem:[#allocation3 + $0x6c] sm:$0xf]
    %v274 = vld [vmem:[#allocation3 + $0x70] sm:$0xff]
    %v275 = vld [vmem:[#allocation3 + $0x78] sm:$0xff]
    %v276 = vld [vmem:[#allocation3 + $0x80] sm:$0xff]
    %v277 = vld [vmem:[#allocation3 + $0x88] sm:$0xf]
    %v278 = vld [vmem:[#allocation3 + $0x8c] sm:$0xff]
    %v279 = vld [vmem:[#allocation3 + $0x94] sm:$0xff]
    %v280 = vld [vmem:[#allocation3 + $0x9c] sm:$0xff]
    %v281 = vld [vmem:[#allocation3 + $0xa4] sm:$0xf]
    %v282 = vld [vmem:[#allocation3 + $0xa8] sm:$0xff]
    %v283 = vld [vmem:[#allocation3 + $0xb0] sm:$0xff]
    %v284 = vld [vmem:[#allocation3 + $0xb8] sm:$0xff]
    %v285 = vld [vmem:[#allocation3 + $0xc0] sm:$0xf]
    %v286 = vld [vmem:[#allocation3 + $0xc4] sm:$0xff]
    %v287 = vld [vmem:[#allocation3 + $0xcc] sm:$0xff]
    %v288 = vld [vmem:[#allocation3 + $0xd4] sm:$0xff]
    %v289 = vld [vmem:[#allocation3 + $0xdc] sm:$0xf]
    %v290 = vld [vmem:[%s6] sm:$0xff]
    %v292 = vlaneseq
    %v293 = vshrl.u32 %v292, 7
    %v294 = vsub.s32 0, %v293
    %v295 = vrot.slane %v290, %v294
    %v296 = vlaneseq
    %v297 = vshrl.u32 %v296, 7
    %v298 = vsub.s32 1, %v297
    %v299 = vrot.slane %v290, %v298
    %v300 = vlaneseq
    %v301 = vshrl.u32 %v300, 7
    %v302 = vsub.s32 2, %v301
    %v303 = vrot.slane %v290, %v302
    %v304 = vlaneseq
    %v305 = vshrl.u32 %v304, 7
    %v306 = vsub.s32 3, %v305
    %v307 = vrot.slane %v290, %v306
    %v308 = vlaneseq
    %v309 = vshrl.u32 %v308, 7
    %v310 = vsub.s32 4, %v309
    %v311 = vrot.slane %v290, %v310
    %v312 = vlaneseq
    %v313 = vshrl.u32 %v312, 7
    %v314 = vsub.s32 5, %v313
    %v315 = vrot.slane %v290, %v314
    %v316 = vlaneseq
    %v317 = vshrl.u32 %v316, 7
    %v318 = vsub.s32 6, %v317
    %v319 = vrot.slane %v290, %v318
    %v359 = vunpack.c.l.b16 %v258
    %v360 = vunpack.c.h.b16 %v258
    %v361 = vunpack.c.l.b16 %v259
    %v362 = vunpack.c.h.b16 %v259
    %v363 = vunpack.c.l.b16 %v260
    %v364 = vunpack.c.h.b16 %v260
    %v365 = vunpack.c.l.b16 %v261
    %v366 = vunpack.c.l.b16 %v262
    %v367 = vunpack.c.h.b16 %v262
    %v368 = vunpack.c.l.b16 %v263
    %v369 = vunpack.c.h.b16 %v263
    %v370 = vunpack.c.l.b16 %v264
    %v371 = vunpack.c.h.b16 %v264
    %v372 = vunpack.c.l.b16 %v265
    %v373 = vunpack.c.l.b16 %v266
    %v374 = vunpack.c.h.b16 %v266
    %v375 = vunpack.c.l.b16 %v267
    %v376 = vunpack.c.h.b16 %v267
    %v377 = vunpack.c.l.b16 %v268
    %v378 = vunpack.c.h.b16 %v268
    %v379 = vunpack.c.l.b16 %v269
    %v380 = vunpack.c.l.b16 %v270
    %v381 = vunpack.c.h.b16 %v270
    %v382 = vunpack.c.l.b16 %v271
    %v383 = vunpack.c.h.b16 %v271
    %v384 = vunpack.c.l.b16 %v272
    %v385 = vunpack.c.h.b16 %v272
    %v386 = vunpack.c.l.b16 %v273
    %v387 = vunpack.c.l.b16 %v274
    %v388 = vunpack.c.h.b16 %v274
    %v389 = vunpack.c.l.b16 %v275
    %v390 = vunpack.c.h.b16 %v275
    %v391 = vunpack.c.l.b16 %v276
    %v392 = vunpack.c.h.b16 %v276
    %v393 = vunpack.c.l.b16 %v277
    %v394 = vunpack.c.l.b16 %v278
    %v395 = vunpack.c.h.b16 %v278
    %v396 = vunpack.c.l.b16 %v279
    %v397 = vunpack.c.h.b16 %v279
    %v398 = vunpack.c.l.b16 %v280
    %v399 = vunpack.c.h.b16 %v280
    %v400 = vunpack.c.l.b16 %v281
    %v401 = vunpack.c.l.b16 %v282
    %v402 = vunpack.c.h.b16 %v282
    %v403 = vunpack.c.l.b16 %v283
    %v404 = vunpack.c.h.b16 %v283
    %v405 = vunpack.c.l.b16 %v284
    %v406 = vunpack.c.h.b16 %v284
    %v407 = vunpack.c.l.b16 %v285
    %v408 = vunpack.c.l.b16 %v286
    %v409 = vunpack.c.h.b16 %v286
    %v410 = vunpack.c.l.b16 %v287
    %v411 = vunpack.c.h.b16 %v287
    %v412 = vunpack.c.l.b16 %v288
    %v413 = vunpack.c.h.b16 %v288
    %v414 = vunpack.c.l.b16 %v289
    %v415 = vpack.c.b16 %v366, %v359
    %v416 = vpack.c.b16 %v367, %v360
    %v417 = vpack.c.b16 %v368, %v361
    %v418 = vpack.c.b16 %v369, %v362
    %v419 = vpack.c.b16 %v370, %v363
    %v420 = vpack.c.b16 %v371, %v364
    %v421 = vpack.c.b16 %v372, %v365
    %v422 = vpack.c.b16 %v380, %v373
    %v423 = vpack.c.b16 %v381, %v374
    %v424 = vpack.c.b16 %v382, %v375
    %v425 = vpack.c.b16 %v383, %v376
    %v426 = vpack.c.b16 %v384, %v377
    %v427 = vpack.c.b16 %v385, %v378
    %v428 = vpack.c.b16 %v386, %v379
    %v429 = vpack.c.b16 %v394, %v387
    %v430 = vpack.c.b16 %v395, %v388
    %v431 = vpack.c.b16 %v396, %v389
    %v432 = vpack.c.b16 %v397, %v390
    %v433 = vpack.c.b16 %v398, %v391
    %v434 = vpack.c.b16 %v399, %v392
    %v435 = vpack.c.b16 %v400, %v393
    %v436 = vpack.c.b16 %v408, %v401
    %v437 = vpack.c.b16 %v409, %v402
    %v438 = vpack.c.b16 %v410, %v403
    %v439 = vpack.c.b16 %v411, %v404
    %v440 = vpack.c.b16 %v412, %v405
    %v441 = vpack.c.b16 %v413, %v406
    %v442 = vpack.c.b16 %v414, %v407
    %vm471 = vcmask 523264
    %v473 = vsel %vm471, %v257, 0
    %475 = vmatprep.subr.bf16.mxu0 %v416
    %476 = vmatpush1.bf16.msra.mxu0 %v415
    %477 = vmatprep.subr.bf16.mxu0 %v423
    %478 = vmatpush1.bf16.msra.mxu0 %v422
    %479 = vmatprep.subr.bf16.mxu0 %v430
    %480 = vmatpush1.bf16.msra.mxu0 %v429
    %481 = vmatprep.subr.bf16.mxu0 %v437
    %482 = vmatpush1.bf16.msra.mxu0 %v436
    %483 = vmatprep.subr.bf16.mxu0 0
    %484 = vmatpush1.bf16.msra.mxu0 0
    %485 = vmatprep.subr.bf16.mxu0 0
    %486 = vmatpush1.bf16.msra.mxu0 0
    %487 = vmatprep.subr.bf16.mxu0 0
    %488 = vmatpush1.bf16.msra.mxu0 0
    %489 = vmatprep.subr.bf16.mxu0 0
    %490 = vmatpush1.bf16.msra.mxu0 0
    %491 = vmatprep.subr.bf16.mxu0 0
    %492 = vmatpush1.bf16.msra.mxu0 0
    %493 = vmatprep.subr.bf16.mxu0 0
    %494 = vmatpush1.bf16.msra.mxu0 0
    %495 = vmatprep.subr.bf16.mxu0 0
    %496 = vmatpush1.bf16.msra.mxu0 0
    %497 = vmatprep.subr.bf16.mxu0 0
    %498 = vmatpush1.bf16.msra.mxu0 0
    %499 = vmatprep.subr.bf16.mxu0 0
    %500 = vmatpush1.bf16.msra.mxu0 0
    %501 = vmatprep.subr.bf16.mxu0 0
    %502 = vmatpush1.bf16.msra.mxu0 0
    %503 = vmatprep.subr.bf16.mxu0 0
    %504 = vmatpush1.bf16.msra.mxu0 0
    %505 = vmatprep.subr.bf16.mxu0 0
    %506 = vmatpush1.bf16.msra.mxu0 0
    %507 = vmatprep.mubr.bf16.mxu0 0
    %508 = vmatmul.mubr.bf16.gmra.mrb[0].mxu0 %v473
    %v509 = vpop.f32.mrb[0].mxu0
    %v510 = vadd.f32 %v295, %v509
    %v511 = vpop.f32.mrb[0].mxu0
    %v512 = vadd.f32 %v299, %v511
    %v513 = vpop.f32.mrb[0].mxu0
    %v514 = vadd.f32 %v295, %v513
    %v515 = vpop.f32.mrb[0].mxu0
    %v516 = vadd.f32 %v299, %v515
    %517 = vdwg.mxu0
    %518 = vmatprep.subr.bf16.mxu0 %v418
    %519 = vmatpush1.bf16.msra.mxu0 %v417
    %520 = vmatprep.subr.bf16.mxu0 %v425
    %521 = vmatpush1.bf16.msra.mxu0 %v424
    %522 = vmatprep.subr.bf16.mxu0 %v432
    %523 = vmatpush1.bf16.msra.mxu0 %v431
    %524 = vmatprep.subr.bf16.mxu0 %v439
    %525 = vmatpush1.bf16.msra.mxu0 %v438
    %526 = vmatprep.subr.bf16.mxu0 0
    %527 = vmatpush1.bf16.msra.mxu0 0
    %528 = vmatprep.subr.bf16.mxu0 0
    %529 = vmatpush1.bf16.msra.mxu0 0
    %530 = vmatprep.subr.bf16.mxu0 0
    %531 = vmatpush1.bf16.msra.mxu0 0
    %532 = vmatprep.subr.bf16.mxu0 0
    %533 = vmatpush1.bf16.msra.mxu0 0
    %534 = vmatprep.subr.bf16.mxu0 0
    %535 = vmatpush1.bf16.msra.mxu0 0
    %536 = vmatprep.subr.bf16.mxu0 0
    %537 = vmatpush1.bf16.msra.mxu0 0
    %538 = vmatprep.subr.bf16.mxu0 0
    %539 = vmatpush1.bf16.msra.mxu0 0
    %540 = vmatprep.subr.bf16.mxu0 0
    %541 = vmatpush1.bf16.msra.mxu0 0
    %542 = vmatprep.subr.bf16.mxu0 0
    %543 = vmatpush1.bf16.msra.mxu0 0
    %544 = vmatprep.subr.bf16.mxu0 0
    %545 = vmatpush1.bf16.msra.mxu0 0
    %546 = vmatprep.subr.bf16.mxu0 0
    %547 = vmatpush1.bf16.msra.mxu0 0
    %548 = vmatprep.subr.bf16.mxu0 0
    %549 = vmatpush1.bf16.msra.mxu0 0
    %550 = vmatprep.mubr.bf16.mxu0 0
    %551 = vmatmul.mubr.bf16.gmra.mrb[0].mxu0 %v473
    %v552 = vpop.f32.mrb[0].mxu0
    %v553 = vadd.f32 %v303, %v552
    %v554 = vpop.f32.mrb[0].mxu0
    %v555 = vadd.f32 %v307, %v554
    %v556 = vpop.f32.mrb[0].mxu0
    %v557 = vadd.f32 %v303, %v556
    %v558 = vpop.f32.mrb[0].mxu0
    %v559 = vadd.f32 %v307, %v558
    %560 = vdwg.mxu0
    %561 = vmatprep.subr.bf16.mxu0 %v420
    %562 = vmatpush1.bf16.msra.mxu0 %v419
    %563 = vmatprep.subr.bf16.mxu0 %v427
    %564 = vmatpush1.bf16.msra.mxu0 %v426
    %565 = vmatprep.subr.bf16.mxu0 %v434
    %566 = vmatpush1.bf16.msra.mxu0 %v433
    %567 = vmatprep.subr.bf16.mxu0 %v441
    %568 = vmatpush1.bf16.msra.mxu0 %v440
    %569 = vmatprep.subr.bf16.mxu0 0
    %570 = vmatpush1.bf16.msra.mxu0 0
    %571 = vmatprep.subr.bf16.mxu0 0
    %572 = vmatpush1.bf16.msra.mxu0 0
    %573 = vmatprep.subr.bf16.mxu0 0
    %574 = vmatpush1.bf16.msra.mxu0 0
    %575 = vmatprep.subr.bf16.mxu0 0
    %576 = vmatpush1.bf16.msra.mxu0 0
    %577 = vmatprep.subr.bf16.mxu0 0
    %578 = vmatpush1.bf16.msra.mxu0 0
    %579 = vmatprep.subr.bf16.mxu0 0
    %580 = vmatpush1.bf16.msra.mxu0 0
    %581 = vmatprep.subr.bf16.mxu0 0
    %582 = vmatpush1.bf16.msra.mxu0 0
    %583 = vmatprep.subr.bf16.mxu0 0
    %584 = vmatpush1.bf16.msra.mxu0 0
    %585 = vmatprep.subr.bf16.mxu0 0
    %586 = vmatpush1.bf16.msra.mxu0 0
    %587 = vmatprep.subr.bf16.mxu0 0
    %588 = vmatpush1.bf16.msra.mxu0 0
    %589 = vmatprep.subr.bf16.mxu0 0
    %590 = vmatpush1.bf16.msra.mxu0 0
    %591 = vmatprep.subr.bf16.mxu0 0
    %592 = vmatpush1.bf16.msra.mxu0 0
    %593 = vmatprep.mubr.bf16.mxu0 0
    %594 = vmatmul.mubr.bf16.gmra.mrb[0].mxu0 %v473
    %v595 = vpop.f32.mrb[0].mxu0
    %v596 = vadd.f32 %v311, %v595
    %v597 = vpop.f32.mrb[0].mxu0
    %v598 = vadd.f32 %v315, %v597
    %v599 = vpop.f32.mrb[0].mxu0
    %v600 = vadd.f32 %v311, %v599
    %v601 = vpop.f32.mrb[0].mxu0
    %v602 = vadd.f32 %v315, %v601
    %603 = vdwg.mxu0
    %604 = vmatprep.subr.bf16.mxu0 0
    %605 = vmatpush1.bf16.msra.mxu0 %v421
    %606 = vmatprep.subr.bf16.mxu0 0
    %607 = vmatpush1.bf16.msra.mxu0 %v428
    %608 = vmatprep.subr.bf16.mxu0 0
    %609 = vmatpush1.bf16.msra.mxu0 %v435
    %610 = vmatprep.subr.bf16.mxu0 0
    %611 = vmatpush1.bf16.msra.mxu0 %v442
    %612 = vmatprep.subr.bf16.mxu0 0
    %613 = vmatpush1.bf16.msra.mxu0 0
    %614 = vmatprep.subr.bf16.mxu0 0
    %615 = vmatpush1.bf16.msra.mxu0 0
    %616 = vmatprep.subr.bf16.mxu0 0
    %617 = vmatpush1.bf16.msra.mxu0 0
    %618 = vmatprep.subr.bf16.mxu0 0
    %619 = vmatpush1.bf16.msra.mxu0 0
    %620 = vmatprep.subr.bf16.mxu0 0
    %621 = vmatpush1.bf16.msra.mxu0 0
    %622 = vmatprep.subr.bf16.mxu0 0
    %623 = vmatpush1.bf16.msra.mxu0 0
    %624 = vmatprep.subr.bf16.mxu0 0
    %625 = vmatpush1.bf16.msra.mxu0 0
    %626 = vmatprep.subr.bf16.mxu0 0
    %627 = vmatpush1.bf16.msra.mxu0 0
    %628 = vmatprep.subr.bf16.mxu0 0
    %629 = vmatpush1.bf16.msra.mxu0 0
    %630 = vmatprep.subr.bf16.mxu0 0
    %631 = vmatpush1.bf16.msra.mxu0 0
    %632 = vmatprep.subr.bf16.mxu0 0
    %633 = vmatpush1.bf16.msra.mxu0 0
    %634 = vmatprep.subr.bf16.mxu0 0
    %635 = vmatpush1.bf16.msra.mxu0 0
    %636 = vmatprep.mubr.bf16.mxu0 0
    %637 = vmatmul.mubr.bf16.gmra.mrb[0].mxu0 %v473
    %v638 = vpop.f32.mrb[0].mxu0
    %v639 = vadd.f32 %v319, %v638
    %v640 = vpop.f32.mrb[0].mxu0
    %v641 = vpop.f32.mrb[0].mxu0
    %v642 = vadd.f32 %v319, %v641
    %v643 = vpop.f32.mrb[0].mxu0
    %644 = vdwg.mxu0
    %v645 = vtanh.pop %v510
    %v646 = vtanh.pop %v512
    %v647 = vtanh.pop %v553
    %v648 = vtanh.pop %v555
    %v649 = vtanh.pop %v596
    %v650 = vtanh.pop %v598
    %v651 = vtanh.pop %v639
    %v652 = vtanh.pop %v514
    %v653 = vtanh.pop %v516
    %v654 = vtanh.pop %v557
    %v655 = vtanh.pop %v559
    %v656 = vtanh.pop %v600
    %v657 = vtanh.pop %v602
    %v658 = vtanh.pop %v642
    %659 = vst [vmem:[#allocation6] sm:$0xff] %v645
    %660 = vst [vmem:[#allocation6 + $0x8] sm:$0xff] %v646
    %661 = vst [vmem:[#allocation6 + $0x10] sm:$0xff] %v647
    %662 = vst [vmem:[#allocation6 + $0x18] sm:$0xff] %v648
    %663 = vst [vmem:[#allocation6 + $0x20] sm:$0xff] %v649
    %664 = vst [vmem:[#allocation6 + $0x28] sm:$0xff] %v650
    %665 = vst [vmem:[#allocation6 + $0x30] sm:$0xff] %v651
    %666 = vst [vmem:[#allocation6 + $0x38] sm:$0xff] %v652
    %667 = vst [vmem:[#allocation6 + $0x40] sm:$0xff] %v653
    %668 = vst [vmem:[#allocation6 + $0x48] sm:$0xff] %v654
    %669 = vst [vmem:[#allocation6 + $0x50] sm:$0xff] %v655
    %670 = vst [vmem:[#allocation6 + $0x58] sm:$0xff] %v656
    %671 = vst [vmem:[#allocation6 + $0x60] sm:$0xff] %v657
    %672 = vst [vmem:[#allocation6 + $0x68] sm:$0xff] %v658
    // Predicated region
    $region38: #{tpu_custom_call.1} parent=1 // pred_check
      _
    $region39: #{tpu_custom_call.1} parent=1 // pred_check_branch
      %674 = sbr.rel (0) target = $region41
    $region40: #{tpu_custom_call.1} parent=1 // pred_region
      %s676 = ssub.s32 1792, 1792
      %677 = vsyncadd [#allocation5], %s676
      %s678 = sshll.u32 [#allocation6], 4
      %s679 = int_to_ptr.vmem [resolvable:$true] %s678
      %684 = dma.vmem_to_hbm [thread:$0]  %s679, 1792, %s7, [#allocation5], 896, 896, 56
    $region41: #{tpu_custom_call.1} parent=1 // pred_fallthru
      _
    // Predicated region
    $region42: #{tpu_custom_call.1} parent=1 // pred_check
      _
    $region43: #{tpu_custom_call.1} parent=1 // pred_check_branch
      %686 = sbr.rel (0) target = $region45
    $region44: #{tpu_custom_call.1} parent=1 // pred_region
      %687 = dma.done [#allocation5], 1792
    $region45: #{tpu_custom_call.1} parent=1 // pred_fallthru
      _
    %688 = vsyncpa [#allocation4], 1
    %689 = vsyncpa [#allocation5], 1

</llo_original>
